<compile_context>
chip_gen: v7x
topology: tpu7x:2x2x1
jax: 0.10.0
libtpu: 0.0.40
codegen_flags: <defaults>
</compile_context>

<pallas_src>
import functools

import jax
import jax.numpy as jnp
from jax import lax
from jax.experimental import pallas as pl
from jax.experimental.pallas import tpu as pltpu


def _sigmoid(x):
    # numerically safe sigmoid (tanh lowers to the EUP)
    return 0.5 * (jnp.tanh(0.5 * x) + 1.0)


def _silu(x):
    return x * _sigmoid(x)


def repatch_kernel(x_ref, dw_w_ref, dw_sh_ref,
                   se_w1_ref, se_b1_ref, se_w2_ref, se_b2_ref,
                   pw_w_ref, pw_sh_ref,
                   o_ref, y_flat_ref, *, ksize, stride, h_out, w_out):
    # x_ref:      (Bblk, stride*stride, Hq, Wq, C)  parity-split input block
    # o_ref:      (Bblk, h_out*w_out, C_out)        output tokens block
    # y_flat_ref: (Bblk, h_out*w_out, C)            VMEM scratch (dw+SiLU result)
    bblk = x_ref.shape[0]
    C = x_ref.shape[-1]
    P = h_out * w_out
    inv_p = 1.0 / float(P)

    x = x_ref[...].astype(jnp.float32)           # (Bblk, s*s, Hq, Wq, C)
    dw_w = dw_w_ref[...].astype(jnp.float32)     # (k, k, C)  BN scale pre-folded
    dw_sh = dw_sh_ref[...].astype(jnp.float32)   # (1, C)     folded bias + BN shift

    # --- depthwise k x k conv, stride `stride`, VALID + folded BN + SiLU ----
    # tap (kh, kw) -> parity plane (kh%s)*s + (kw%s), offsets (kh//s, kw//s);
    # all slices are unit-stride / integer-indexed.
    acc = None
    for kh in range(ksize):
        ph, qh = kh % stride, kh // stride
        for kw in range(ksize):
            pw_, qw = kw % stride, kw // stride
            pidx = ph * stride + pw_
            patch = x[:, pidx, qh:qh + h_out, qw:qw + w_out, :]   # (Bblk,h_out,w_out,C)
            term = patch * dw_w[kh, kw]                            # (C,) broadcast
            acc = term if acc is None else acc + term
    y = _silu(acc + dw_sh)                                         # (Bblk,h_out,w_out,C)

    # --- stage as a contiguous (Bblk, P, C) slab in VMEM scratch ------------
    for i in range(h_out):
        y_flat_ref[:, i * w_out:(i + 1) * w_out, :] = y[:, i]
    flat = y_flat_ref[...]                                         # (Bblk, P, C)

    # --- SE: global average pool -> 1x1 convs (batched matmuls) -> gate -----
    pooled = jnp.sum(flat, axis=1) * inv_p                         # (Bblk, C)
    hdn = _silu(jnp.dot(pooled, se_w1_ref[...],
                        preferred_element_type=jnp.float32) + se_b1_ref[...])
    gate = _sigmoid(jnp.dot(hdn, se_w2_ref[...],
                            preferred_element_type=jnp.float32) + se_b2_ref[...])

    gated = flat * gate[:, None, :]                                # (Bblk, P, C)

    # --- pointwise 1x1 conv (fused over all spatial positions) + BN shift ---
    pw_w = pw_w_ref[...].astype(jnp.float32)                       # (C, C_out) scale folded
    pw_sh = pw_sh_ref[...].astype(jnp.float32)                     # (1, C_out)
    outs = [jnp.dot(gated[b], pw_w, preferred_element_type=jnp.float32)
            for b in range(bblk)]                                  # each (P, C_out)
    out = jnp.stack(outs, axis=0) + pw_sh                          # (Bblk, P, C_out)
    o_ref[...] = out.astype(o_ref.dtype)                           # single dense store


def _pick_batch_block(batch, cap=8):
    bb = min(batch, cap)
    while batch % bb:
        bb -= 1
    return bb


def repatch_forward(x_tokens, params, *, ksize=3, stride=2, padding=0, batch_block=8):
    assert padding == 0, "Repatch default uses padding=0"
    B, N, C_in = x_tokens.shape
    h = w = int(round(N ** 0.5))
    assert h * w == N
    assert h % stride == 0 and w % stride == 0, "spatial dims must divide stride"
    h_out = (h - ksize) // stride + 1
    w_out = (w - ksize) // stride + 1
    assert h_out > 0 and w_out > 0
    P = h_out * w_out
    C_out = params["pw_w"].shape[1]

    # fold BN scales into the conv weights (host-side constant folding)
    dw_w = (params["dw_w"] * params["dw_scale"][0]).astype(jnp.float32)   # (k,k,C)
    dw_sh = params["dw_shift"].astype(jnp.float32)                        # (1,C)
    pw_w = (params["pw_w"] * params["pw_scale"]).astype(jnp.float32)      # (C,C_out)
    pw_sh = params["pw_shift"].astype(jnp.float32)                        # (1,C_out)
    se_w1, se_b1 = params["se_w1"], params["se_b1"]
    se_w2, se_b2 = params["se_w2"], params["se_b2"]

    # layout plumbing: tokens -> NHWC image -> stride-parity split so all
    # in-kernel tap accesses are unit-stride.
    hq, wq = h // stride, w // stride
    x_img = x_tokens.reshape(B, hq, stride, wq, stride, C_in)
    x_split = x_img.transpose(0, 2, 4, 1, 3, 5).reshape(B, stride * stride, hq, wq, C_in)

    bb = _pick_batch_block(B, batch_block)
    grid = (B // bb,)

    kernel = functools.partial(repatch_kernel, ksize=ksize, stride=stride,
                               h_out=h_out, w_out=w_out)

    def param_spec(arr):
        nd = arr.ndim
        return pl.BlockSpec(arr.shape, lambda b, _nd=nd: (0,) * _nd)

    out = pl.pallas_call(
        kernel,
        out_shape=jax.ShapeDtypeStruct((B, P, C_out), x_tokens.dtype),
        grid=grid,
        in_specs=[
            pl.BlockSpec((bb, stride * stride, hq, wq, C_in),
                         lambda b: (b, 0, 0, 0, 0)),
            param_spec(dw_w), param_spec(dw_sh),
            param_spec(se_w1), param_spec(se_b1),
            param_spec(se_w2), param_spec(se_b2),
            param_spec(pw_w), param_spec(pw_sh),
        ],
        out_specs=pl.BlockSpec((bb, P, C_out), lambda b: (b, 0, 0)),
        scratch_shapes=[pltpu.VMEM((bb, P, C_in), jnp.float32)],
        compiler_params=pltpu.CompilerParams(dimension_semantics=("parallel",)),
    )(x_split, dw_w, dw_sh, se_w1, se_b1, se_w2, se_b2, pw_w, pw_sh)

    # already token layout: (B, h_out*w_out, C_out) == rearrange('b c h w -> b (h w) c')
    return out


def make_params(key, c_in, c_out, ksize=3, r=4, eps=1e-5):
    """Deterministic synthetic parameters, PyTorch layout -> kernel layout."""
    c_r = c_in // r
    keys = jax.random.split(key, 16)

    def nrm(k, shape, scale=0.1):
        return scale * jax.random.normal(k, shape, jnp.float32)

    # depthwise conv: PyTorch weight (C, 1, k, k), bias (C,), BatchNorm2d(C)
    dw_w_pt = nrm(keys[0], (c_in, 1, ksize, ksize))
    dw_b = nrm(keys[1], (c_in,))
    dw_gamma = 1.0 + nrm(keys[2], (c_in,))
    dw_beta = nrm(keys[3], (c_in,))
    dw_mean = nrm(keys[4], (c_in,))
    dw_var = 1.0 + 0.1 * jnp.abs(jax.random.normal(keys[5], (c_in,), jnp.float32))
    dw_scale = dw_gamma / jnp.sqrt(dw_var + eps)
    dw_shift = (dw_b - dw_mean) * dw_scale + dw_beta

    # SE: conv1x1 (C -> C/4) + bias, conv1x1 (C/4 -> C) + bias
    se_w1_pt = nrm(keys[6], (c_r, c_in, 1, 1))
    se_b1 = nrm(keys[7], (c_r,))
    se_w2_pt = nrm(keys[8], (c_in, c_r, 1, 1))
    se_b2 = nrm(keys[9], (c_in,))

    # pointwise conv: (C_out, C, 1, 1), bias (C_out,), BatchNorm2d(C_out), no act
    pw_w_pt = nrm(keys[10], (c_out, c_in, 1, 1))
    pw_b = nrm(keys[11], (c_out,))
    pw_gamma = 1.0 + nrm(keys[12], (c_out,))
    pw_beta = nrm(keys[13], (c_out,))
    pw_mean = nrm(keys[14], (c_out,))
    pw_var = 1.0 + 0.1 * jnp.abs(jax.random.normal(keys[15], (c_out,), jnp.float32))
    pw_scale = pw_gamma / jnp.sqrt(pw_var + eps)
    pw_shift = (pw_b - pw_mean) * pw_scale + pw_beta

    return {
        "dw_w": jnp.transpose(dw_w_pt[:, 0], (1, 2, 0)),        # (k, k, C)
        "dw_scale": dw_scale.reshape(1, c_in),
        "dw_shift": dw_shift.reshape(1, c_in),
        "se_w1": jnp.transpose(se_w1_pt[:, :, 0, 0], (1, 0)),   # (C, C/4)
        "se_b1": se_b1.reshape(1, c_r),
        "se_w2": jnp.transpose(se_w2_pt[:, :, 0, 0], (1, 0)),   # (C/4, C)
        "se_b2": se_b2.reshape(1, c_in),
        "pw_w": jnp.transpose(pw_w_pt[:, :, 0, 0], (1, 0)),     # (C, C_out)
        "pw_scale": pw_scale.reshape(1, c_out),
        "pw_shift": pw_shift.reshape(1, c_out),
    }


def ref_forward(x_tokens, params, *, ksize=3, stride=2):
    """Pure-JAX reference of the same (eval-mode) forward pass."""
    B, N, C = x_tokens.shape
    h = w = int(round(N ** 0.5))
    x = x_tokens.reshape(B, h, w, C)
    dw_w = params["dw_w"][:, :, None, :]   # HWIO with groups = C
    y = lax.conv_general_dilated(
        x, dw_w, (stride, stride), "VALID",
        dimension_numbers=("NHWC", "HWIO", "NHWC"), feature_group_count=C)
    y = y * params["dw_scale"] + params["dw_shift"]
    y = jax.nn.silu(y)
    pooled = jnp.mean(y, axis=(1, 2))                                   # (B, C)
    hdn = jax.nn.silu(pooled @ params["se_w1"] + params["se_b1"])
    gate = jax.nn.sigmoid(hdn @ params["se_w2"] + params["se_b2"])      # (B, C)
    y = y * gate[:, None, None, :]
    out = jnp.einsum("bhwc,cd->bhwd", y, params["pw_w"])
    out = out * params["pw_scale"] + params["pw_shift"]
    return out.reshape(B, -1, params["pw_w"].shape[1])


if __name__ == "__main__":
    key = jax.random.PRNGKey(0)
    k_x, k_p = jax.random.split(key)

    B, C_in, C_out = 2, 32, 64
    H = W = 8
    N = H * W                       # tokens: (B, N, C_in) = (2, 64, 32)

    x = jax.random.normal(k_x, (B, N, C_in), jnp.float32)
    params = make_params(k_p, C_in, C_out)

    out = repatch_forward(x, params)
    out = jax.block_until_ready(out)

    ref = ref_forward(x, params)
    assert out.shape == ref.shape == (B, 9, C_out), (out.shape, ref.shape)
    max_err = float(jnp.max(jnp.abs(out - ref)))
    if max_err > 2e-3:
        raise AssertionError(f"kernel/reference mismatch, max abs err = {max_err}")

    print("KERNEL_OK")
</pallas_src>

<mosaic_0001>
module attributes {stable_mosaic.version = 11 : i64} {
  func.func @repatch_kernel(%arg0: i32, %arg1: memref<2x4x4x4x32xf32, #tpu.memory_space<vmem>>, %arg2: memref<3x3x32xf32, #tpu.memory_space<vmem>>, %arg3: memref<1x32xf32, #tpu.memory_space<vmem>>, %arg4: memref<32x8xf32, #tpu.memory_space<vmem>>, %arg5: memref<1x8xf32, #tpu.memory_space<vmem>>, %arg6: memref<8x32xf32, #tpu.memory_space<vmem>>, %arg7: memref<1x32xf32, #tpu.memory_space<vmem>>, %arg8: memref<32x64xf32, #tpu.memory_space<vmem>>, %arg9: memref<1x64xf32, #tpu.memory_space<vmem>>, %arg10: memref<2x9x64xf32, #tpu.memory_space<vmem>>, %arg11: memref<2x9x32xf32, #tpu.memory_space<vmem>>) attributes {dimension_semantics = [#tpu.dimension_semantics<parallel>], iteration_bounds = array<i64: 1>, scalar_prefetch = 0 : i64, scratch_operands = 1 : i64, tpu.core_type = #tpu.core_type<tc>, window_params = [{transform_indices = @transform_0, window_bounds = array<i64: 2, 4, 4, 4, 32>}, {pipeline_mode = #tpu.pipeline_mode<synchronous>, transform_indices = @transform_1, window_bounds = array<i64: 3, 3, 32>}, {pipeline_mode = #tpu.pipeline_mode<synchronous>, transform_indices = @transform_2, window_bounds = array<i64: 1, 32>}, {pipeline_mode = #tpu.pipeline_mode<synchronous>, transform_indices = @transform_3, window_bounds = array<i64: 32, 8>}, {pipeline_mode = #tpu.pipeline_mode<synchronous>, transform_indices = @transform_4, window_bounds = array<i64: 1, 8>}, {pipeline_mode = #tpu.pipeline_mode<synchronous>, transform_indices = @transform_5, window_bounds = array<i64: 8, 32>}, {pipeline_mode = #tpu.pipeline_mode<synchronous>, transform_indices = @transform_6, window_bounds = array<i64: 1, 32>}, {pipeline_mode = #tpu.pipeline_mode<synchronous>, transform_indices = @transform_7, window_bounds = array<i64: 32, 64>}, {pipeline_mode = #tpu.pipeline_mode<synchronous>, transform_indices = @transform_8, window_bounds = array<i64: 1, 64>}, {transform_indices = @transform_9, window_bounds = array<i64: 2, 9, 64>}]} {
    %c0 = arith.constant 0 : index
    %c0_0 = arith.constant 0 : index
    %c0_1 = arith.constant 0 : index
    %c0_2 = arith.constant 0 : index
    %c0_3 = arith.constant 0 : index
    %0 = vector.load %arg1[%c0, %c0_0, %c0_1, %c0_2, %c0_3] : memref<2x4x4x4x32xf32, #tpu.memory_space<vmem>>, vector<2x4x4x4x32xf32>
    %c0_4 = arith.constant 0 : index
    %c0_5 = arith.constant 0 : index
    %c0_6 = arith.constant 0 : index
    %1 = vector.load %arg2[%c0_4, %c0_5, %c0_6] : memref<3x3x32xf32, #tpu.memory_space<vmem>>, vector<3x3x32xf32>
    %c0_7 = arith.constant 0 : index
    %c0_8 = arith.constant 0 : index
    %2 = vector.load %arg3[%c0_7, %c0_8] : memref<1x32xf32, #tpu.memory_space<vmem>>, vector<1x32xf32>
    %3 = vector.extract_strided_slice %0 {offsets = [0, 0, 0, 0, 0], sizes = [2, 1, 3, 3, 32], strides = [1, 1, 1, 1, 1]} : vector<2x4x4x4x32xf32> to vector<2x1x3x3x32xf32>
    %4 = vector.shape_cast %3 : vector<2x1x3x3x32xf32> to vector<2x3x3x32xf32>
    %5 = vector.extract_strided_slice %1 {offsets = [0, 0, 0], sizes = [1, 1, 32], strides = [1, 1, 1]} : vector<3x3x32xf32> to vector<1x1x32xf32>
    %6 = vector.shape_cast %5 : vector<1x1x32xf32> to vector<32xf32>
    %7 = vector.shape_cast %6 : vector<32xf32> to vector<1x1x1x32xf32>
    %8 = vector.broadcast %7 : vector<1x1x1x32xf32> to vector<2x3x3x32xf32>
    %9 = arith.mulf %4, %8 : vector<2x3x3x32xf32>
    %10 = vector.extract_strided_slice %0 {offsets = [0, 1, 0, 0, 0], sizes = [2, 1, 3, 3, 32], strides = [1, 1, 1, 1, 1]} : vector<2x4x4x4x32xf32> to vector<2x1x3x3x32xf32>
    %11 = vector.shape_cast %10 : vector<2x1x3x3x32xf32> to vector<2x3x3x32xf32>
    %12 = vector.extract_strided_slice %1 {offsets = [0, 1, 0], sizes = [1, 1, 32], strides = [1, 1, 1]} : vector<3x3x32xf32> to vector<1x1x32xf32>
    %13 = vector.shape_cast %12 : vector<1x1x32xf32> to vector<32xf32>
    %14 = vector.shape_cast %13 : vector<32xf32> to vector<1x1x1x32xf32>
    %15 = vector.broadcast %14 : vector<1x1x1x32xf32> to vector<2x3x3x32xf32>
    %16 = arith.mulf %11, %15 : vector<2x3x3x32xf32>
    %17 = arith.addf %9, %16 : vector<2x3x3x32xf32>
    %18 = vector.extract_strided_slice %0 {offsets = [0, 0, 0, 1, 0], sizes = [2, 1, 3, 3, 32], strides = [1, 1, 1, 1, 1]} : vector<2x4x4x4x32xf32> to vector<2x1x3x3x32xf32>
    %19 = vector.shape_cast %18 : vector<2x1x3x3x32xf32> to vector<2x3x3x32xf32>
    %20 = vector.extract_strided_slice %1 {offsets = [0, 2, 0], sizes = [1, 1, 32], strides = [1, 1, 1]} : vector<3x3x32xf32> to vector<1x1x32xf32>
    %21 = vector.shape_cast %20 : vector<1x1x32xf32> to vector<32xf32>
    %22 = vector.shape_cast %21 : vector<32xf32> to vector<1x1x1x32xf32>
    %23 = vector.broadcast %22 : vector<1x1x1x32xf32> to vector<2x3x3x32xf32>
    %24 = arith.mulf %19, %23 : vector<2x3x3x32xf32>
    %25 = arith.addf %17, %24 : vector<2x3x3x32xf32>
    %26 = vector.extract_strided_slice %0 {offsets = [0, 2, 0, 0, 0], sizes = [2, 1, 3, 3, 32], strides = [1, 1, 1, 1, 1]} : vector<2x4x4x4x32xf32> to vector<2x1x3x3x32xf32>
    %27 = vector.shape_cast %26 : vector<2x1x3x3x32xf32> to vector<2x3x3x32xf32>
    %28 = vector.extract_strided_slice %1 {offsets = [1, 0, 0], sizes = [1, 1, 32], strides = [1, 1, 1]} : vector<3x3x32xf32> to vector<1x1x32xf32>
    %29 = vector.shape_cast %28 : vector<1x1x32xf32> to vector<32xf32>
    %30 = vector.shape_cast %29 : vector<32xf32> to vector<1x1x1x32xf32>
    %31 = vector.broadcast %30 : vector<1x1x1x32xf32> to vector<2x3x3x32xf32>
    %32 = arith.mulf %27, %31 : vector<2x3x3x32xf32>
    %33 = arith.addf %25, %32 : vector<2x3x3x32xf32>
    %34 = vector.extract_strided_slice %0 {offsets = [0, 3, 0, 0, 0], sizes = [2, 1, 3, 3, 32], strides = [1, 1, 1, 1, 1]} : vector<2x4x4x4x32xf32> to vector<2x1x3x3x32xf32>
    %35 = vector.shape_cast %34 : vector<2x1x3x3x32xf32> to vector<2x3x3x32xf32>
    %36 = vector.extract_strided_slice %1 {offsets = [1, 1, 0], sizes = [1, 1, 32], strides = [1, 1, 1]} : vector<3x3x32xf32> to vector<1x1x32xf32>
    %37 = vector.shape_cast %36 : vector<1x1x32xf32> to vector<32xf32>
    %38 = vector.shape_cast %37 : vector<32xf32> to vector<1x1x1x32xf32>
    %39 = vector.broadcast %38 : vector<1x1x1x32xf32> to vector<2x3x3x32xf32>
    %40 = arith.mulf %35, %39 : vector<2x3x3x32xf32>
    %41 = arith.addf %33, %40 : vector<2x3x3x32xf32>
    %42 = vector.extract_strided_slice %0 {offsets = [0, 2, 0, 1, 0], sizes = [2, 1, 3, 3, 32], strides = [1, 1, 1, 1, 1]} : vector<2x4x4x4x32xf32> to vector<2x1x3x3x32xf32>
    %43 = vector.shape_cast %42 : vector<2x1x3x3x32xf32> to vector<2x3x3x32xf32>
    %44 = vector.extract_strided_slice %1 {offsets = [1, 2, 0], sizes = [1, 1, 32], strides = [1, 1, 1]} : vector<3x3x32xf32> to vector<1x1x32xf32>
    %45 = vector.shape_cast %44 : vector<1x1x32xf32> to vector<32xf32>
    %46 = vector.shape_cast %45 : vector<32xf32> to vector<1x1x1x32xf32>
    %47 = vector.broadcast %46 : vector<1x1x1x32xf32> to vector<2x3x3x32xf32>
    %48 = arith.mulf %43, %47 : vector<2x3x3x32xf32>
    %49 = arith.addf %41, %48 : vector<2x3x3x32xf32>
    %50 = vector.extract_strided_slice %0 {offsets = [0, 0, 1, 0, 0], sizes = [2, 1, 3, 3, 32], strides = [1, 1, 1, 1, 1]} : vector<2x4x4x4x32xf32> to vector<2x1x3x3x32xf32>
    %51 = vector.shape_cast %50 : vector<2x1x3x3x32xf32> to vector<2x3x3x32xf32>
    %52 = vector.extract_strided_slice %1 {offsets = [2, 0, 0], sizes = [1, 1, 32], strides = [1, 1, 1]} : vector<3x3x32xf32> to vector<1x1x32xf32>
    %53 = vector.shape_cast %52 : vector<1x1x32xf32> to vector<32xf32>
    %54 = vector.shape_cast %53 : vector<32xf32> to vector<1x1x1x32xf32>
    %55 = vector.broadcast %54 : vector<1x1x1x32xf32> to vector<2x3x3x32xf32>
    %56 = arith.mulf %51, %55 : vector<2x3x3x32xf32>
    %57 = arith.addf %49, %56 : vector<2x3x3x32xf32>
    %58 = vector.extract_strided_slice %0 {offsets = [0, 1, 1, 0, 0], sizes = [2, 1, 3, 3, 32], strides = [1, 1, 1, 1, 1]} : vector<2x4x4x4x32xf32> to vector<2x1x3x3x32xf32>
    %59 = vector.shape_cast %58 : vector<2x1x3x3x32xf32> to vector<2x3x3x32xf32>
    %60 = vector.extract_strided_slice %1 {offsets = [2, 1, 0], sizes = [1, 1, 32], strides = [1, 1, 1]} : vector<3x3x32xf32> to vector<1x1x32xf32>
    %61 = vector.shape_cast %60 : vector<1x1x32xf32> to vector<32xf32>
    %62 = vector.shape_cast %61 : vector<32xf32> to vector<1x1x1x32xf32>
    %63 = vector.broadcast %62 : vector<1x1x1x32xf32> to vector<2x3x3x32xf32>
    %64 = arith.mulf %59, %63 : vector<2x3x3x32xf32>
    %65 = arith.addf %57, %64 : vector<2x3x3x32xf32>
    %66 = vector.extract_strided_slice %0 {offsets = [0, 0, 1, 1, 0], sizes = [2, 1, 3, 3, 32], strides = [1, 1, 1, 1, 1]} : vector<2x4x4x4x32xf32> to vector<2x1x3x3x32xf32>
    %67 = vector.shape_cast %66 : vector<2x1x3x3x32xf32> to vector<2x3x3x32xf32>
    %68 = vector.extract_strided_slice %1 {offsets = [2, 2, 0], sizes = [1, 1, 32], strides = [1, 1, 1]} : vector<3x3x32xf32> to vector<1x1x32xf32>
    %69 = vector.shape_cast %68 : vector<1x1x32xf32> to vector<32xf32>
    %70 = vector.shape_cast %69 : vector<32xf32> to vector<1x1x1x32xf32>
    %71 = vector.broadcast %70 : vector<1x1x1x32xf32> to vector<2x3x3x32xf32>
    %72 = arith.mulf %67, %71 : vector<2x3x3x32xf32>
    %73 = arith.addf %65, %72 : vector<2x3x3x32xf32>
    %74 = vector.shape_cast %2 : vector<1x32xf32> to vector<1x1x1x32xf32>
    %75 = vector.broadcast %74 : vector<1x1x1x32xf32> to vector<2x3x3x32xf32>
    %76 = arith.addf %73, %75 : vector<2x3x3x32xf32>
    %cst = arith.constant 5.000000e-01 : f32
    %77 = vector.broadcast %cst : f32 to vector<2x3x3x32xf32>
    %78 = arith.mulf %77, %76 : vector<2x3x3x32xf32>
    %79 = math.tanh %78 : vector<2x3x3x32xf32>
    %cst_9 = arith.constant 1.000000e+00 : f32
    %80 = vector.broadcast %cst_9 : f32 to vector<2x3x3x32xf32>
    %81 = arith.addf %79, %80 : vector<2x3x3x32xf32>
    %cst_10 = arith.constant 5.000000e-01 : f32
    %82 = vector.broadcast %cst_10 : f32 to vector<2x3x3x32xf32>
    %83 = arith.mulf %82, %81 : vector<2x3x3x32xf32>
    %84 = arith.mulf %76, %83 : vector<2x3x3x32xf32>
    %85 = vector.extract_strided_slice %84 {offsets = [0, 0, 0, 0], sizes = [2, 1, 3, 32], strides = [1, 1, 1, 1]} : vector<2x3x3x32xf32> to vector<2x1x3x32xf32>
    %86 = vector.shape_cast %85 : vector<2x1x3x32xf32> to vector<2x3x32xf32>
    %c0_11 = arith.constant 0 : index
    %c0_12 = arith.constant 0 : index
    %c0_13 = arith.constant 0 : index
    %87 = vector.load %arg11[%c0_11, %c0_12, %c0_13] : memref<2x9x32xf32, #tpu.memory_space<vmem>>, vector<2x3x32xf32>
    tpu.vector_store %arg11[%c0_11, %c0_12, %c0_13], %86 {strides = array<i32>} : memref<2x9x32xf32, #tpu.memory_space<vmem>>, vector<2x3x32xf32>,
    %88 = vector.extract_strided_slice %84 {offsets = [0, 1, 0, 0], sizes = [2, 1, 3, 32], strides = [1, 1, 1, 1]} : vector<2x3x3x32xf32> to vector<2x1x3x32xf32>
    %89 = vector.shape_cast %88 : vector<2x1x3x32xf32> to vector<2x3x32xf32>
    %c0_14 = arith.constant 0 : index
    %c3 = arith.constant 3 : index
    %c0_15 = arith.constant 0 : index
    %90 = vector.load %arg11[%c0_14, %c3, %c0_15] : memref<2x9x32xf32, #tpu.memory_space<vmem>>, vector<2x3x32xf32>
    tpu.vector_store %arg11[%c0_14, %c3, %c0_15], %89 {strides = array<i32>} : memref<2x9x32xf32, #tpu.memory_space<vmem>>, vector<2x3x32xf32>,
    %91 = vector.extract_strided_slice %84 {offsets = [0, 2, 0, 0], sizes = [2, 1, 3, 32], strides = [1, 1, 1, 1]} : vector<2x3x3x32xf32> to vector<2x1x3x32xf32>
    %92 = vector.shape_cast %91 : vector<2x1x3x32xf32> to vector<2x3x32xf32>
    %c0_16 = arith.constant 0 : index
    %c6 = arith.constant 6 : index
    %c0_17 = arith.constant 0 : index
    %93 = vector.load %arg11[%c0_16, %c6, %c0_17] : memref<2x9x32xf32, #tpu.memory_space<vmem>>, vector<2x3x32xf32>
    tpu.vector_store %arg11[%c0_16, %c6, %c0_17], %92 {strides = array<i32>} : memref<2x9x32xf32, #tpu.memory_space<vmem>>, vector<2x3x32xf32>,
    %c0_18 = arith.constant 0 : index
    %c0_19 = arith.constant 0 : index
    %c0_20 = arith.constant 0 : index
    %94 = vector.load %arg11[%c0_18, %c0_19, %c0_20] : memref<2x9x32xf32, #tpu.memory_space<vmem>>, vector<2x9x32xf32>
    %cst_21 = arith.constant dense<0.000000e+00> : vector<2x32xf32>
    %95 = vector.multi_reduction <add>, %94, %cst_21 [1] : vector<2x9x32xf32> to vector<2x32xf32>
    %cst_22 = arith.constant 0.111111112 : f32
    %96 = vector.broadcast %cst_22 : f32 to vector<2x32xf32>
    %97 = arith.mulf %95, %96 : vector<2x32xf32>
    %c0_23 = arith.constant 0 : index
    %c0_24 = arith.constant 0 : index
    %98 = vector.load %arg4[%c0_23, %c0_24] : memref<32x8xf32, #tpu.memory_space<vmem>>, vector<32x8xf32>
    %cst_25 = arith.constant dense<0.000000e+00> : vector<2x8xf32>
    %99 = tpu.matmul %97, %98, %cst_25 {dimension_numbers = #tpu.dot_dimension_numbers<[1], [0], [0], [1], [0, 0, 1, 1], [], []>} : vector<2x32xf32>, vector<32x8xf32>, vector<2x8xf32> -> vector<2x8xf32>
    %c0_26 = arith.constant 0 : index
    %c0_27 = arith.constant 0 : index
    %100 = vector.load %arg5[%c0_26, %c0_27] : memref<1x8xf32, #tpu.memory_space<vmem>>, vector<1x8xf32>
    %101 = vector.broadcast %100 : vector<1x8xf32> to vector<2x8xf32>
    %102 = arith.addf %99, %101 : vector<2x8xf32>
    %cst_28 = arith.constant 5.000000e-01 : f32
    %103 = vector.broadcast %cst_28 : f32 to vector<2x8xf32>
    %104 = arith.mulf %103, %102 : vector<2x8xf32>
    %105 = math.tanh %104 : vector<2x8xf32>
    %cst_29 = arith.constant 1.000000e+00 : f32
    %106 = vector.broadcast %cst_29 : f32 to vector<2x8xf32>
    %107 = arith.addf %105, %106 : vector<2x8xf32>
    %cst_30 = arith.constant 5.000000e-01 : f32
    %108 = vector.broadcast %cst_30 : f32 to vector<2x8xf32>
    %109 = arith.mulf %108, %107 : vector<2x8xf32>
    %110 = arith.mulf %102, %109 : vector<2x8xf32>
    %c0_31 = arith.constant 0 : index
    %c0_32 = arith.constant 0 : index
    %111 = vector.load %arg6[%c0_31, %c0_32] : memref<8x32xf32, #tpu.memory_space<vmem>>, vector<8x32xf32>
    %cst_33 = arith.constant dense<0.000000e+00> : vector<2x32xf32>
    %112 = tpu.matmul %110, %111, %cst_33 {dimension_numbers = #tpu.dot_dimension_numbers<[1], [0], [0], [1], [0, 0, 1, 1], [], []>} : vector<2x8xf32>, vector<8x32xf32>, vector<2x32xf32> -> vector<2x32xf32>
    %c0_34 = arith.constant 0 : index
    %c0_35 = arith.constant 0 : index
    %113 = vector.load %arg7[%c0_34, %c0_35] : memref<1x32xf32, #tpu.memory_space<vmem>>, vector<1x32xf32>
    %114 = vector.broadcast %113 : vector<1x32xf32> to vector<2x32xf32>
    %115 = arith.addf %112, %114 : vector<2x32xf32>
    %cst_36 = arith.constant 5.000000e-01 : f32
    %116 = vector.broadcast %cst_36 : f32 to vector<2x32xf32>
    %117 = arith.mulf %116, %115 : vector<2x32xf32>
    %118 = math.tanh %117 : vector<2x32xf32>
    %cst_37 = arith.constant 1.000000e+00 : f32
    %119 = vector.broadcast %cst_37 : f32 to vector<2x32xf32>
    %120 = arith.addf %118, %119 : vector<2x32xf32>
    %cst_38 = arith.constant 5.000000e-01 : f32
    %121 = vector.broadcast %cst_38 : f32 to vector<2x32xf32>
    %122 = arith.mulf %121, %120 : vector<2x32xf32>
    %123 = vector.shape_cast %122 : vector<2x32xf32> to vector<2x1x32xf32>
    %124 = vector.broadcast %123 : vector<2x1x32xf32> to vector<2x9x32xf32>
    %125 = arith.mulf %94, %124 : vector<2x9x32xf32>
    %c0_39 = arith.constant 0 : index
    %c0_40 = arith.constant 0 : index
    %126 = vector.load %arg8[%c0_39, %c0_40] : memref<32x64xf32, #tpu.memory_space<vmem>>, vector<32x64xf32>
    %c0_41 = arith.constant 0 : index
    %c0_42 = arith.constant 0 : index
    %127 = vector.load %arg9[%c0_41, %c0_42] : memref<1x64xf32, #tpu.memory_space<vmem>>, vector<1x64xf32>
    %128 = vector.extract_strided_slice %125 {offsets = [0, 0, 0], sizes = [1, 9, 32], strides = [1, 1, 1]} : vector<2x9x32xf32> to vector<1x9x32xf32>
    %129 = vector.shape_cast %128 : vector<1x9x32xf32> to vector<9x32xf32>
    %cst_43 = arith.constant dense<0.000000e+00> : vector<9x64xf32>
    %130 = tpu.matmul %129, %126, %cst_43 {dimension_numbers = #tpu.dot_dimension_numbers<[1], [0], [0], [1], [0, 0, 1, 1], [], []>} : vector<9x32xf32>, vector<32x64xf32>, vector<9x64xf32> -> vector<9x64xf32>
    %131 = vector.extract_strided_slice %125 {offsets = [1, 0, 0], sizes = [1, 9, 32], strides = [1, 1, 1]} : vector<2x9x32xf32> to vector<1x9x32xf32>
    %132 = vector.shape_cast %131 : vector<1x9x32xf32> to vector<9x32xf32>
    %cst_44 = arith.constant dense<0.000000e+00> : vector<9x64xf32>
    %133 = tpu.matmul %132, %126, %cst_44 {dimension_numbers = #tpu.dot_dimension_numbers<[1], [0], [0], [1], [0, 0, 1, 1], [], []>} : vector<9x32xf32>, vector<32x64xf32>, vector<9x64xf32> -> vector<9x64xf32>
    %134 = vector.shape_cast %130 : vector<9x64xf32> to vector<1x9x64xf32>
    %135 = vector.shape_cast %133 : vector<9x64xf32> to vector<1x9x64xf32>
    %136 = tpu.concatenate %134, %135 in 0 : vector<1x9x64xf32>, vector<1x9x64xf32> -> vector<2x9x64xf32>
    %137 = vector.shape_cast %127 : vector<1x64xf32> to vector<1x1x64xf32>
    %138 = vector.broadcast %137 : vector<1x1x64xf32> to vector<2x9x64xf32>
    %139 = arith.addf %136, %138 : vector<2x9x64xf32>
    %c0_45 = arith.constant 0 : index
    %c0_46 = arith.constant 0 : index
    %c0_47 = arith.constant 0 : index
    %140 = vector.load %arg10[%c0_45, %c0_46, %c0_47] : memref<2x9x64xf32, #tpu.memory_space<vmem>>, vector<2x9x64xf32>
    tpu.vector_store %arg10[%c0_45, %c0_46, %c0_47], %139 {strides = array<i32>} : memref<2x9x64xf32, #tpu.memory_space<vmem>>, vector<2x9x64xf32>,
    return
  }
  func.func @transform_0(%arg0: i32) -> (i32, i32, i32, i32, i32) {
    %c0_i32 = arith.constant 0 : i32
    %c0_i32_0 = arith.constant 0 : i32
    %c0_i32_1 = arith.constant 0 : i32
    %c0_i32_2 = arith.constant 0 : i32
    %c0_i32_3 = arith.constant 0 : i32
    return %arg0, %c0_i32, %c0_i32_0, %c0_i32_1, %c0_i32_2 : i32, i32, i32, i32, i32
  }
  func.func @transform_1(%arg0: i32) -> (i32, i32, i32) {
    %c0_i32 = arith.constant 0 : i32
    %c0_i32_0 = arith.constant 0 : i32
    %c0_i32_1 = arith.constant 0 : i32
    %c0_i32_2 = arith.constant 0 : i32
    return %c0_i32, %c0_i32_0, %c0_i32_1 : i32, i32, i32
  }
  func.func @transform_2(%arg0: i32) -> (i32, i32) {
    %c0_i32 = arith.constant 0 : i32
    %c0_i32_0 = arith.constant 0 : i32
    %c0_i32_1 = arith.constant 0 : i32
    return %c0_i32, %c0_i32_0 : i32, i32
  }
  func.func @transform_3(%arg0: i32) -> (i32, i32) {
    %c0_i32 = arith.constant 0 : i32
    %c0_i32_0 = arith.constant 0 : i32
    %c0_i32_1 = arith.constant 0 : i32
    return %c0_i32, %c0_i32_0 : i32, i32
  }
  func.func @transform_4(%arg0: i32) -> (i32, i32) {
    %c0_i32 = arith.constant 0 : i32
    %c0_i32_0 = arith.constant 0 : i32
    %c0_i32_1 = arith.constant 0 : i32
    return %c0_i32, %c0_i32_0 : i32, i32
  }
  func.func @transform_5(%arg0: i32) -> (i32, i32) {
    %c0_i32 = arith.constant 0 : i32
    %c0_i32_0 = arith.constant 0 : i32
    %c0_i32_1 = arith.constant 0 : i32
    return %c0_i32, %c0_i32_0 : i32, i32
  }
  func.func @transform_6(%arg0: i32) -> (i32, i32) {
    %c0_i32 = arith.constant 0 : i32
    %c0_i32_0 = arith.constant 0 : i32
    %c0_i32_1 = arith.constant 0 : i32
    return %c0_i32, %c0_i32_0 : i32, i32
  }
  func.func @transform_7(%arg0: i32) -> (i32, i32) {
    %c0_i32 = arith.constant 0 : i32
    %c0_i32_0 = arith.constant 0 : i32
    %c0_i32_1 = arith.constant 0 : i32
    return %c0_i32, %c0_i32_0 : i32, i32
  }
  func.func @transform_8(%arg0: i32) -> (i32, i32) {
    %c0_i32 = arith.constant 0 : i32
    %c0_i32_0 = arith.constant 0 : i32
    %c0_i32_1 = arith.constant 0 : i32
    return %c0_i32, %c0_i32_0 : i32, i32
  }
  func.func @transform_9(%arg0: i32) -> (i32, i32, i32) {
    %c0_i32 = arith.constant 0 : i32
    %c0_i32_0 = arith.constant 0 : i32
    %c0_i32_1 = arith.constant 0 : i32
    return %arg0, %c0_i32, %c0_i32_0 : i32, i32, i32
  }
}

</mosaic_0001>

<llo_original>
// kernel: tpu_custom_call.1
$region0: #{tpu_custom_call.1}
  #allocation0 [shape = 'u32[]', space=smem, size = 0x4, offset = 0x4, fixed_abs, tag = 'smem constant byte address 0x4 - core index']
  #allocation1 [shape = 'u32[144,128]{1,0:T(1,128)}', space=vmem, size = 0x12000, scoped, tag = 'internal scratch']
  #allocation2 [shape = 'f32[2,9,32]{2,1,0:T(8,128)}', space=vmem, size = 0x4000, scoped, tag = 'scratch operand']
  %s0 = inlined_call_operand.hbm [shape: f32[2,4,4,4,32], index: 0, kind: input, shape index: {}]
  %s1 = inlined_call_operand.vmem [shape: f32[3,3,32], index: 1, kind: input, shape index: {}]
  %s2 = inlined_call_operand.vmem [shape: f32[1,32], index: 2, kind: input, shape index: {}]
  %s3 = inlined_call_operand.vmem [shape: f32[32,8], index: 3, kind: input, shape index: {}]
  %s4 = inlined_call_operand.vmem [shape: f32[1,8], index: 4, kind: input, shape index: {}]
  %s5 = inlined_call_operand.vmem [shape: f32[8,32], index: 5, kind: input, shape index: {}]
  %s6 = inlined_call_operand.vmem [shape: f32[1,32], index: 6, kind: input, shape index: {}]
  %s7 = inlined_call_operand.vmem [shape: f32[32,64], index: 7, kind: input, shape index: {}]
  %s8 = inlined_call_operand.vmem [shape: f32[1,64], index: 8, kind: input, shape index: {}]
  %s9 = inlined_call_operand.vmem [shape: f32[2,9,64], index: 9, kind: output, shape index: {}]
  %s10 = sld [smem:[#allocation0]]
  $region50: #{tpu_custom_call.1} parent=0
    _
  %s12 = ssub.s32 1, %s10
  %s13 = scalar_select 0, %s12, %s10
  $region1: #{tpu_custom_call.1} parent=0
    #allocation3 [shape = 'u8[65536]{0}', space=vmem, size = 0x10000, scoped, tag = 'input window, operand 0, single buffered']
    #allocation4 [shape = 's32[1]{0}', space=sflag, size = 0x4, scoped, tag = 'scoped memory for tpu_custom_call.1']
    %14 = vsyncpa [#allocation4], 0
    // Predicated region
    $region2: #{tpu_custom_call.1} parent=1 // pred_check
      _
    $region3: #{tpu_custom_call.1} parent=1 // pred_check_branch
      %16 = sbr.rel (0) target = $region5
    $region4: #{tpu_custom_call.1} parent=1 // pred_region
      %s18 = ssub.s32 2048, 2048
      %19 = vsyncadd [#allocation4], %s18
      %s20 = sshll.u32 [#allocation3], 4
      %s21 = int_to_ptr.vmem [resolvable:$true] %s20
      %26 = dma.hbm_to_vmem [thread:$0]  %s0, 2048, %s21, [#allocation4], 64, 64, 4
    $region5: #{tpu_custom_call.1} parent=1 // pred_fallthru
      _
    // Predicated region
    $region6: #{tpu_custom_call.1} parent=1 // pred_check
      _
    $region7: #{tpu_custom_call.1} parent=1 // pred_check_branch
      %28 = sbr.rel (0) target = $region9
    $region8: #{tpu_custom_call.1} parent=1 // pred_region
      _
    $region9: #{tpu_custom_call.1} parent=1 // pred_fallthru
      _
    // Predicated region
    $region10: #{tpu_custom_call.1} parent=1 // pred_check
      _
    $region11: #{tpu_custom_call.1} parent=1 // pred_check_branch
      %30 = sbr.rel (0) target = $region13
    $region12: #{tpu_custom_call.1} parent=1 // pred_region
      _
    $region13: #{tpu_custom_call.1} parent=1 // pred_fallthru
      _
    // Predicated region
    $region14: #{tpu_custom_call.1} parent=1 // pred_check
      _
    $region15: #{tpu_custom_call.1} parent=1 // pred_check_branch
      %32 = sbr.rel (0) target = $region17
    $region16: #{tpu_custom_call.1} parent=1 // pred_region
      _
    $region17: #{tpu_custom_call.1} parent=1 // pred_fallthru
      _
    // Predicated region
    $region18: #{tpu_custom_call.1} parent=1 // pred_check
      _
    $region19: #{tpu_custom_call.1} parent=1 // pred_check_branch
      %34 = sbr.rel (0) target = $region21
    $region20: #{tpu_custom_call.1} parent=1 // pred_region
      _
    $region21: #{tpu_custom_call.1} parent=1 // pred_fallthru
      _
    // Predicated region
    $region22: #{tpu_custom_call.1} parent=1 // pred_check
      _
    $region23: #{tpu_custom_call.1} parent=1 // pred_check_branch
      %36 = sbr.rel (0) target = $region25
    $region24: #{tpu_custom_call.1} parent=1 // pred_region
      _
    $region25: #{tpu_custom_call.1} parent=1 // pred_fallthru
      _
    // Predicated region
    $region26: #{tpu_custom_call.1} parent=1 // pred_check
      _
    $region27: #{tpu_custom_call.1} parent=1 // pred_check_branch
      %38 = sbr.rel (0) target = $region29
    $region28: #{tpu_custom_call.1} parent=1 // pred_region
      _
    $region29: #{tpu_custom_call.1} parent=1 // pred_fallthru
      _
    // Predicated region
    $region30: #{tpu_custom_call.1} parent=1 // pred_check
      _
    $region31: #{tpu_custom_call.1} parent=1 // pred_check_branch
      %40 = sbr.rel (0) target = $region33
    $region32: #{tpu_custom_call.1} parent=1 // pred_region
      _
    $region33: #{tpu_custom_call.1} parent=1 // pred_fallthru
      _
    // Predicated region
    $region34: #{tpu_custom_call.1} parent=1 // pred_check
      _
    $region35: #{tpu_custom_call.1} parent=1 // pred_check_branch
      %42 = sbr.rel (0) target = $region37
    $region36: #{tpu_custom_call.1} parent=1 // pred_region
      _
    $region37: #{tpu_custom_call.1} parent=1 // pred_fallthru
      _
    // Predicated region
    $region38: #{tpu_custom_call.1} parent=1 // pred_check
      _
    $region39: #{tpu_custom_call.1} parent=1 // pred_check_branch
      %44 = sbr.rel (0) target = $region41
    $region40: #{tpu_custom_call.1} parent=1 // pred_region
      %45 = dma.done [#allocation4], 2048
    $region41: #{tpu_custom_call.1} parent=1 // pred_fallthru
      _
    %v46 = vld [vmem:[#allocation3] sm:$0xf]
    %v47 = vld [vmem:[#allocation3 + $0x4] sm:$0xf]
    %v48 = vld [vmem:[#allocation3 + $0x8] sm:$0xf]
    %v49 = vld [vmem:[#allocation3 + $0xc] sm:$0xf]
    %v50 = vld [vmem:[#allocation3 + $0x10] sm:$0xf]
    %v51 = vld [vmem:[#allocation3 + $0x14] sm:$0xf]
    %v52 = vld [vmem:[#allocation3 + $0x18] sm:$0xf]
    %v53 = vld [vmem:[#allocation3 + $0x1c] sm:$0xf]
    %v54 = vld [vmem:[#allocation3 + $0x20] sm:$0xf]
    %v55 = vld [vmem:[#allocation3 + $0x24] sm:$0xf]
    %v56 = vld [vmem:[#allocation3 + $0x28] sm:$0xf]
    %v57 = vld [vmem:[#allocation3 + $0x30] sm:$0xf]
    %v58 = vld [vmem:[#allocation3 + $0x34] sm:$0xf]
    %v59 = vld [vmem:[#allocation3 + $0x38] sm:$0xf]
    %v60 = vld [vmem:[#allocation3 + $0x40] sm:$0xf]
    %v61 = vld [vmem:[#allocation3 + $0x44] sm:$0xf]
    %v62 = vld [vmem:[#allocation3 + $0x48] sm:$0xf]
    %v63 = vld [vmem:[#allocation3 + $0x4c] sm:$0xf]
    %v64 = vld [vmem:[#allocation3 + $0x50] sm:$0xf]
    %v65 = vld [vmem:[#allocation3 + $0x54] sm:$0xf]
    %v66 = vld [vmem:[#allocation3 + $0x58] sm:$0xf]
    %v67 = vld [vmem:[#allocation3 + $0x5c] sm:$0xf]
    %v68 = vld [vmem:[#allocation3 + $0x60] sm:$0xf]
    %v69 = vld [vmem:[#allocation3 + $0x64] sm:$0xf]
    %v70 = vld [vmem:[#allocation3 + $0x68] sm:$0xf]
    %v71 = vld [vmem:[#allocation3 + $0x70] sm:$0xf]
    %v72 = vld [vmem:[#allocation3 + $0x74] sm:$0xf]
    %v73 = vld [vmem:[#allocation3 + $0x78] sm:$0xf]
    %v74 = vld [vmem:[%s1] sm:$0x7]
    %v75 = vld [vmem:[%s1 + $0x4] sm:$0x7]
    %v76 = vld [vmem:[%s1 + $0x8] sm:$0x7]
    %v77 = vld [vmem:[%s2] sm:$0x1]
    %v78 = vlaneseq
    %v79 = vshrl.u32 %v78, 7
    %v80 = vsub.s32 0, %v79
    %v81 = vrot.slane %v74, %v80
    %v82 = vmul.f32 %v46, %v81
    %v83 = vmul.f32 %v47, %v81
    %v84 = vmul.f32 %v48, %v81
    %v85 = vmul.f32 %v60, %v81
    %v86 = vmul.f32 %v61, %v81
    %v87 = vmul.f32 %v62, %v81
    %v88 = vlaneseq
    %v89 = vshrl.u32 %v88, 7
    %v90 = vsub.s32 1, %v89
    %v91 = vrot.slane %v74, %v90
    %v92 = vmul.f32 %v50, %v91
    %v93 = vmul.f32 %v51, %v91
    %v94 = vmul.f32 %v52, %v91
    %v95 = vmul.f32 %v64, %v91
    %v96 = vmul.f32 %v65, %v91
    %v97 = vmul.f32 %v66, %v91
    %v98 = vadd.f32 %v82, %v92
    %v99 = vadd.f32 %v83, %v93
    %v100 = vadd.f32 %v84, %v94
    %v101 = vadd.f32 %v85, %v95
    %v102 = vadd.f32 %v86, %v96
    %v103 = vadd.f32 %v87, %v97
    %v104 = vlaneseq
    %v105 = vshrl.u32 %v104, 7
    %v106 = vsub.s32 2, %v105
    %v107 = vrot.slane %v74, %v106
    %v108 = vmul.f32 %v46, %v107
    %v109 = vmul.f32 %v47, %v107
    %v110 = vmul.f32 %v48, %v107
    %v111 = vmul.f32 %v60, %v107
    %v112 = vmul.f32 %v61, %v107
    %v113 = vmul.f32 %v62, %v107
    %v120 = vrot.slane %v108, 1
    %v121 = vrot.slane %v109, 1
    %v122 = vrot.slane %v110, 1
    %v123 = vrot.slane %v111, 1
    %v124 = vrot.slane %v112, 1
    %v125 = vrot.slane %v113, 1
    %v132 = vadd.f32 %v98, %v120
    %v133 = vadd.f32 %v99, %v121
    %v134 = vadd.f32 %v100, %v122
    %v135 = vadd.f32 %v101, %v123
    %v136 = vadd.f32 %v102, %v124
    %v137 = vadd.f32 %v103, %v125
    %v138 = vlaneseq
    %v139 = vshrl.u32 %v138, 7
    %v140 = vsub.s32 0, %v139
    %v141 = vrot.slane %v75, %v140
    %v142 = vmul.f32 %v54, %v141
    %v143 = vmul.f32 %v55, %v141
    %v144 = vmul.f32 %v56, %v141
    %v145 = vmul.f32 %v68, %v141
    %v146 = vmul.f32 %v69, %v141
    %v147 = vmul.f32 %v70, %v141
    %v148 = vadd.f32 %v132, %v142
    %v149 = vadd.f32 %v133, %v143
    %v150 = vadd.f32 %v134, %v144
    %v151 = vadd.f32 %v135, %v145
    %v152 = vadd.f32 %v136, %v146
    %v153 = vadd.f32 %v137, %v147
    %v154 = vlaneseq
    %v155 = vshrl.u32 %v154, 7
    %v156 = vsub.s32 1, %v155
    %v157 = vrot.slane %v75, %v156
    %v158 = vmul.f32 %v57, %v157
    %v159 = vmul.f32 %v58, %v157
    %v160 = vmul.f32 %v59, %v157
    %v161 = vmul.f32 %v71, %v157
    %v162 = vmul.f32 %v72, %v157
    %v163 = vmul.f32 %v73, %v157
    %v164 = vadd.f32 %v148, %v158
    %v165 = vadd.f32 %v149, %v159
    %v166 = vadd.f32 %v150, %v160
    %v167 = vadd.f32 %v151, %v161
    %v168 = vadd.f32 %v152, %v162
    %v169 = vadd.f32 %v153, %v163
    %v170 = vlaneseq
    %v171 = vshrl.u32 %v170, 7
    %v172 = vsub.s32 2, %v171
    %v173 = vrot.slane %v75, %v172
    %v174 = vmul.f32 %v54, %v173
    %v175 = vmul.f32 %v55, %v173
    %v176 = vmul.f32 %v56, %v173
    %v177 = vmul.f32 %v68, %v173
    %v178 = vmul.f32 %v69, %v173
    %v179 = vmul.f32 %v70, %v173
    %v186 = vrot.slane %v174, 1
    %v187 = vrot.slane %v175, 1
    %v188 = vrot.slane %v176, 1
    %v189 = vrot.slane %v177, 1
    %v190 = vrot.slane %v178, 1
    %v191 = vrot.slane %v179, 1
    %v198 = vadd.f32 %v164, %v186
    %v199 = vadd.f32 %v165, %v187
    %v200 = vadd.f32 %v166, %v188
    %v201 = vadd.f32 %v167, %v189
    %v202 = vadd.f32 %v168, %v190
    %v203 = vadd.f32 %v169, %v191
    %v204 = vlaneseq
    %v205 = vshrl.u32 %v204, 7
    %v206 = vsub.s32 0, %v205
    %v207 = vrot.slane %v76, %v206
    %v208 = vmul.f32 %v47, %v207
    %v209 = vmul.f32 %v48, %v207
    %v210 = vmul.f32 %v49, %v207
    %v211 = vmul.f32 %v61, %v207
    %v212 = vmul.f32 %v62, %v207
    %v213 = vmul.f32 %v63, %v207
    %v214 = vadd.f32 %v198, %v208
    %v215 = vadd.f32 %v199, %v209
    %v216 = vadd.f32 %v200, %v210
    %v217 = vadd.f32 %v201, %v211
    %v218 = vadd.f32 %v202, %v212
    %v219 = vadd.f32 %v203, %v213
    %v220 = vlaneseq
    %v221 = vshrl.u32 %v220, 7
    %v222 = vsub.s32 1, %v221
    %v223 = vrot.slane %v76, %v222
    %v224 = vmul.f32 %v51, %v223
    %v225 = vmul.f32 %v52, %v223
    %v226 = vmul.f32 %v53, %v223
    %v227 = vmul.f32 %v65, %v223
    %v228 = vmul.f32 %v66, %v223
    %v229 = vmul.f32 %v67, %v223
    %v230 = vadd.f32 %v214, %v224
    %v231 = vadd.f32 %v215, %v225
    %v232 = vadd.f32 %v216, %v226
    %v233 = vadd.f32 %v217, %v227
    %v234 = vadd.f32 %v218, %v228
    %v235 = vadd.f32 %v219, %v229
    %v236 = vlaneseq
    %v237 = vshrl.u32 %v236, 7
    %v238 = vsub.s32 2, %v237
    %v239 = vrot.slane %v76, %v238
    %v240 = vmul.f32 %v47, %v239
    %v241 = vmul.f32 %v48, %v239
    %v242 = vmul.f32 %v49, %v239
    %v243 = vmul.f32 %v61, %v239
    %v244 = vmul.f32 %v62, %v239
    %v245 = vmul.f32 %v63, %v239
    %v252 = vrot.slane %v240, 1
    %v253 = vrot.slane %v241, 1
    %v254 = vrot.slane %v242, 1
    %v255 = vrot.slane %v243, 1
    %v256 = vrot.slane %v244, 1
    %v257 = vrot.slane %v245, 1
    %v264 = vadd.f32 %v230, %v252
    %v265 = vadd.f32 %v231, %v253
    %v266 = vadd.f32 %v232, %v254
    %v267 = vadd.f32 %v233, %v255
    %v268 = vadd.f32 %v234, %v256
    %v269 = vadd.f32 %v235, %v257
    %v271 = vlaneseq
    %v272 = vshrl.u32 %v271, 7
    %v273 = vsub.s32 0, %v272
    %v274 = vrot.slane %v77, %v273
    %v276 = vadd.f32 %v264, %v274
    %v277 = vadd.f32 %v265, %v274
    %v278 = vadd.f32 %v266, %v274
    %v279 = vadd.f32 %v267, %v274
    %v280 = vadd.f32 %v268, %v274
    %v281 = vadd.f32 %v269, %v274
    %v282 = vmul.f32 %v276, 0.5
    %v283 = vmul.f32 %v277, 0.5
    %v284 = vmul.f32 %v278, 0.5
    %v285 = vmul.f32 %v279, 0.5
    %v286 = vmul.f32 %v280, 0.5
    %v287 = vmul.f32 %v281, 0.5
    %v288 = vtanh.pop %v282
    %v289 = vtanh.pop %v283
    %v290 = vtanh.pop %v284
    %v291 = vtanh.pop %v285
    %v292 = vtanh.pop %v286
    %v293 = vtanh.pop %v287
    %v294 = vadd.f32 %v288, 1.0
    %v295 = vadd.f32 %v289, 1.0
    %v296 = vadd.f32 %v290, 1.0
    %v297 = vadd.f32 %v291, 1.0
    %v298 = vadd.f32 %v292, 1.0
    %v299 = vadd.f32 %v293, 1.0
    %v300 = vmul.f32 %v294, 0.5
    %v301 = vmul.f32 %v295, 0.5
    %v302 = vmul.f32 %v296, 0.5
    %v303 = vmul.f32 %v297, 0.5
    %v304 = vmul.f32 %v298, 0.5
    %v305 = vmul.f32 %v299, 0.5
    %v306 = vmul.f32 %v276, %v300
    %v307 = vmul.f32 %v277, %v301
    %v308 = vmul.f32 %v278, %v302
    %v309 = vmul.f32 %v279, %v303
    %v310 = vmul.f32 %v280, %v304
    %v311 = vmul.f32 %v281, %v305
    %vm312 = vcmask 256000
    %313 = vst.msk [vmem:[#allocation2] sm:$0x7] %vm312, %v306
    %314 = vst.msk [vmem:[#allocation2 + $0x10] sm:$0x7] %vm312, %v309
    %315 = vst.msk [vmem:[#allocation2 + $0x3] sm:$0x7] %vm312, %v307
    %316 = vst.msk [vmem:[#allocation2 + $0x13] sm:$0x7] %vm312, %v310
    %317 = vst.msk [vmem:[#allocation2 + $0x6] sm:$0x7] %vm312, %v308
    %318 = vst.msk [vmem:[#allocation2 + $0x16] sm:$0x7] %vm312, %v311
    %v319 = vld [vmem:[#allocation2] sm:$0xff]
    %v320 = vld [vmem:[#allocation2 + $0x8] sm:$0x1]
    %v321 = vld [vmem:[#allocation2 + $0x10] sm:$0xff]
    %v322 = vld [vmem:[#allocation2 + $0x18] sm:$0x1]
    %vm323 = vcmask 261120
    %v324 = vsel %vm323, %v319, 0.0
    %vm325 = vcmask 253952
    %v326 = vsel %vm325, %v320, 0.0
    %v327 = vadd.f32 %v324, %v326
    %v328 = vrot.slane %v327, 4
    %v329 = vadd.f32 %v327, %v328
    %v330 = vrot.slane %v329, 2
    %v331 = vadd.f32 %v329, %v330
    %v332 = vrot.slane %v331, 1
    %v333 = vadd.f32 %v331, %v332
    %v334 = vsel %vm323, %v321, 0.0
    %v335 = vsel %vm325, %v322, 0.0
    %v336 = vadd.f32 %v334, %v335
    %v337 = vrot.slane %v336, 4
    %v338 = vadd.f32 %v336, %v337
    %v339 = vrot.slane %v338, 2
    %v340 = vadd.f32 %v338, %v339
    %v341 = vrot.slane %v340, 1
    %v342 = vadd.f32 %v340, %v341
    %v343 = vmul.f32 %v333, 0.11111111
    %v344 = vmul.f32 %v342, 0.11111111
    %v345 = vld [vmem:[%s3] sm:$0xff]
    %v346 = vld [vmem:[%s3 + $0x8] sm:$0xff]
    %v347 = vld [vmem:[%s3 + $0x10] sm:$0xff]
    %v348 = vld [vmem:[%s3 + $0x18] sm:$0xff]
    %v349 = vld [vmem:[%s4] sm:$0x1]
    %v351 = vlaneseq
    %v352 = vshrl.u32 %v351, 7
    %v353 = vsub.s32 0, %v352
    %v354 = vrot.slane %v349, %v353
    %vm358 = vcmask 1041409
    %v359 = vsel %vm358, %v344, %v343
    %v360 = vsel %vm323, %v359, 0
    %362 = vmatprep.subr.mxu0 0.0
    %363 = vmatpush1.msra.mxu0 %v345
    %364 = vmatprep.subr.mxu0 0.0
    %365 = vmatpush1.msra.mxu0 %v346
    %366 = vmatprep.subr.mxu0 0.0
    %367 = vmatpush1.msra.mxu0 %v347
    %368 = vmatprep.subr.mxu0 0.0
    %369 = vmatpush1.msra.mxu0 %v348
    %370 = vmatprep.subr.mxu0 0.0
    %371 = vmatpush1.msra.mxu0 0.0
    %372 = vmatprep.subr.mxu0 0.0
    %373 = vmatpush1.msra.mxu0 0.0
    %374 = vmatprep.subr.mxu0 0.0
    %375 = vmatpush1.msra.mxu0 0.0
    %376 = vmatprep.subr.mxu0 0.0
    %377 = vmatpush1.msra.mxu0 0.0
    %378 = vmatprep.subr.mxu0 0.0
    %379 = vmatpush1.msra.mxu0 0.0
    %380 = vmatprep.subr.mxu0 0.0
    %381 = vmatpush1.msra.mxu0 0.0
    %382 = vmatprep.subr.mxu0 0.0
    %383 = vmatpush1.msra.mxu0 0.0
    %384 = vmatprep.subr.mxu0 0.0
    %385 = vmatpush1.msra.mxu0 0.0
    %386 = vmatprep.subr.mxu0 0.0
    %387 = vmatpush1.msra.mxu0 0.0
    %388 = vmatprep.subr.mxu0 0.0
    %389 = vmatpush1.msra.mxu0 0.0
    %390 = vmatprep.subr.mxu0 0.0
    %391 = vmatpush1.msra.mxu0 0.0
    %392 = vmatprep.subr.mxu0 0.0
    %393 = vmatpush1.msra.mxu0 0.0
    %394 = vmatprep.subr.mxu0 0.0
    %395 = vmatpush1.msra.mxu0 0.0
    %396 = vmatprep.subr.mxu0 0.0
    %397 = vmatpush1.msra.mxu0 0.0
    %398 = vmatprep.subr.mxu0 0.0
    %399 = vmatpush1.msra.mxu0 0.0
    %400 = vmatprep.subr.mxu0 0.0
    %401 = vmatpush1.msra.mxu0 0.0
    %402 = vmatprep.subr.mxu0 0.0
    %403 = vmatpush1.msra.mxu0 0.0
    %404 = vmatprep.subr.mxu0 0.0
    %405 = vmatpush1.msra.mxu0 0.0
    %406 = vmatprep.subr.mxu0 0.0
    %407 = vmatpush1.msra.mxu0 0.0
    %408 = vmatprep.subr.mxu0 0.0
    %409 = vmatpush1.msra.mxu0 0.0
    %410 = vmatprep.subr.mxu0 0.0
    %411 = vmatpush1.msra.mxu0 0.0
    %412 = vmatprep.subr.mxu0 0.0
    %413 = vmatpush1.msra.mxu0 0.0
    %414 = vmatprep.subr.mxu0 0.0
    %415 = vmatpush1.msra.mxu0 0.0
    %416 = vmatprep.subr.mxu0 0.0
    %417 = vmatpush1.msra.mxu0 0.0
    %418 = vmatprep.subr.mxu0 0.0
    %419 = vmatpush1.msra.mxu0 0.0
    %420 = vmatprep.subr.mxu0 0.0
    %421 = vmatpush1.msra.mxu0 0.0
    %422 = vmatprep.subr.mxu0 0.0
    %423 = vmatpush1.msra.mxu0 0.0
    %424 = vmatprep.subr.mxu0 0.0
    %425 = vmatpush1.msra.mxu0 0.0
    %426 = vmatprep.mubr.f32.mxu0 0.0
    %427 = vmatmul.mubr.f32.gmra.mrb[0].mxu0 %v360
    %v428 = vpop.f32.mrb[0].mxu0
    %v429 = vadd.f32 %v354, %v428
    %v430 = vpop.f32.mrb[0].mxu0
    %431 = vdwg.mxu0
    %v432 = vmul.f32 %v429, 0.5
    %v433 = vtanh.pop %v432
    %v434 = vadd.f32 %v433, 1.0
    %v435 = vmul.f32 %v434, 0.5
    %v436 = vmul.f32 %v429, %v435
    %v437 = vld [vmem:[%s5] sm:$0xff]
    %v438 = vld [vmem:[%s6] sm:$0x1]
    %v440 = vlaneseq
    %v441 = vshrl.u32 %v440, 7
    %v442 = vsub.s32 0, %v441
    %v443 = vrot.slane %v438, %v442
    %vm445 = vcmask 64512
    %v447 = vsel %vm445, %v436, 0
    %449 = vmatprep.subr.mxu0 0.0
    %450 = vmatpush1.msra.mxu0 %v437
    %451 = vmatprep.subr.mxu0 0.0
    %452 = vmatpush1.msra.mxu0 0.0
    %453 = vmatprep.subr.mxu0 0.0
    %454 = vmatpush1.msra.mxu0 0.0
    %455 = vmatprep.subr.mxu0 0.0
    %456 = vmatpush1.msra.mxu0 0.0
    %457 = vmatprep.subr.mxu0 0.0
    %458 = vmatpush1.msra.mxu0 0.0
    %459 = vmatprep.subr.mxu0 0.0
    %460 = vmatpush1.msra.mxu0 0.0
    %461 = vmatprep.subr.mxu0 0.0
    %462 = vmatpush1.msra.mxu0 0.0
    %463 = vmatprep.subr.mxu0 0.0
    %464 = vmatpush1.msra.mxu0 0.0
    %465 = vmatprep.subr.mxu0 0.0
    %466 = vmatpush1.msra.mxu0 0.0
    %467 = vmatprep.subr.mxu0 0.0
    %468 = vmatpush1.msra.mxu0 0.0
    %469 = vmatprep.subr.mxu0 0.0
    %470 = vmatpush1.msra.mxu0 0.0
    %471 = vmatprep.subr.mxu0 0.0
    %472 = vmatpush1.msra.mxu0 0.0
    %473 = vmatprep.subr.mxu0 0.0
    %474 = vmatpush1.msra.mxu0 0.0
    %475 = vmatprep.subr.mxu0 0.0
    %476 = vmatpush1.msra.mxu0 0.0
    %477 = vmatprep.subr.mxu0 0.0
    %478 = vmatpush1.msra.mxu0 0.0
    %479 = vmatprep.subr.mxu0 0.0
    %480 = vmatpush1.msra.mxu0 0.0
    %481 = vmatprep.subr.mxu0 0.0
    %482 = vmatpush1.msra.mxu0 0.0
    %483 = vmatprep.subr.mxu0 0.0
    %484 = vmatpush1.msra.mxu0 0.0
    %485 = vmatprep.subr.mxu0 0.0
    %486 = vmatpush1.msra.mxu0 0.0
    %487 = vmatprep.subr.mxu0 0.0
    %488 = vmatpush1.msra.mxu0 0.0
    %489 = vmatprep.subr.mxu0 0.0
    %490 = vmatpush1.msra.mxu0 0.0
    %491 = vmatprep.subr.mxu0 0.0
    %492 = vmatpush1.msra.mxu0 0.0
    %493 = vmatprep.subr.mxu0 0.0
    %494 = vmatpush1.msra.mxu0 0.0
    %495 = vmatprep.subr.mxu0 0.0
    %496 = vmatpush1.msra.mxu0 0.0
    %497 = vmatprep.subr.mxu0 0.0
    %498 = vmatpush1.msra.mxu0 0.0
    %499 = vmatprep.subr.mxu0 0.0
    %500 = vmatpush1.msra.mxu0 0.0
    %501 = vmatprep.subr.mxu0 0.0
    %502 = vmatpush1.msra.mxu0 0.0
    %503 = vmatprep.subr.mxu0 0.0
    %504 = vmatpush1.msra.mxu0 0.0
    %505 = vmatprep.subr.mxu0 0.0
    %506 = vmatpush1.msra.mxu0 0.0
    %507 = vmatprep.subr.mxu0 0.0
    %508 = vmatpush1.msra.mxu0 0.0
    %509 = vmatprep.subr.mxu0 0.0
    %510 = vmatpush1.msra.mxu0 0.0
    %511 = vmatprep.subr.mxu0 0.0
    %512 = vmatpush1.msra.mxu0 0.0
    %513 = vmatprep.mubr.f32.mxu0 0.0
    %514 = vmatmul.mubr.f32.gmra.mrb[0].mxu0 %v447
    %v515 = vpop.f32.mrb[0].mxu0
    %v516 = vadd.f32 %v443, %v515
    %v517 = vpop.f32.mrb[0].mxu0
    %518 = vdwg.mxu0
    %v519 = vmul.f32 %v516, 0.5
    %v520 = vtanh.pop %v519
    %v521 = vadd.f32 %v520, 1.0
    %v522 = vmul.f32 %v521, 0.5
    %v525 = vunpack.c.l.s4 1966171168
    %v526 = vunpack.c.0.s8 %v525
    %v527 = vlaneseq
    %v528 = vshrl.u32 %v527, 7
    %v529 = vsub.s32 %v526, %v528
    %v530 = vrot.slane %v522, %v529
    %v531 = vcombine.high %v530, %v530
    %v533 = vunpack.c.l.s4 1966171168
    %v534 = vunpack.c.0.s8 %v533
    %v535 = vlaneseq
    %v536 = vshrl.u32 %v535, 7
    %v537 = vsub.s32 %v534, %v536
    %v538 = vrot.slane %v530, %v537
    %v540 = vunpack.c.l.s4 1966171168
    %v541 = vunpack.c.0.s8 %v540
    %v542 = vlaneseq
    %v543 = vshrl.u32 %v542, 7
    %v544 = vsub.s32 %v541, %v543
    %v545 = vrot.slane %v531, %v544
    %v546 = vlaneseq
    %v547 = vshrl.u32 %v546, 7
    %v548 = vsub.s32 0, %v547
    %v549 = vrot.slane %v538, %v548
    %v550 = vlaneseq
    %v551 = vshrl.u32 %v550, 7
    %v552 = vsub.s32 0, %v551
    %v553 = vrot.slane %v545, %v552
    %v556 = vmul.f32 %v319, %v549
    %v557 = vmul.f32 %v320, %v549
    %v558 = vmul.f32 %v321, %v553
    %v559 = vmul.f32 %v322, %v553
    %v560 = vld [vmem:[%s7] sm:$0xff]
    %v561 = vld [vmem:[%s7 + $0x8] sm:$0xff]
    %v562 = vld [vmem:[%s7 + $0x10] sm:$0xff]
    %v563 = vld [vmem:[%s7 + $0x18] sm:$0xff]
    %v564 = vld [vmem:[%s8] sm:$0x1]
    %v566 = vsel %vm323, %v556, 0
    %v569 = vsel %vm323, %v557, 0
    %571 = vmatprep.subr.mxu0 0.0
    %572 = vmatpush1.msra.mxu0 %v560
    %573 = vmatprep.subr.mxu0 0.0
    %574 = vmatpush1.msra.mxu0 %v561
    %575 = vmatprep.subr.mxu0 0.0
    %576 = vmatpush1.msra.mxu0 %v562
    %577 = vmatprep.subr.mxu0 0.0
    %578 = vmatpush1.msra.mxu0 %v563
    %579 = vmatprep.subr.mxu0 0.0
    %580 = vmatpush1.msra.mxu0 0.0
    %581 = vmatprep.subr.mxu0 0.0
    %582 = vmatpush1.msra.mxu0 0.0
    %583 = vmatprep.subr.mxu0 0.0
    %584 = vmatpush1.msra.mxu0 0.0
    %585 = vmatprep.subr.mxu0 0.0
    %586 = vmatpush1.msra.mxu0 0.0
    %587 = vmatprep.subr.mxu0 0.0
    %588 = vmatpush1.msra.mxu0 0.0
    %589 = vmatprep.subr.mxu0 0.0
    %590 = vmatpush1.msra.mxu0 0.0
    %591 = vmatprep.subr.mxu0 0.0
    %592 = vmatpush1.msra.mxu0 0.0
    %593 = vmatprep.subr.mxu0 0.0
    %594 = vmatpush1.msra.mxu0 0.0
    %595 = vmatprep.subr.mxu0 0.0
    %596 = vmatpush1.msra.mxu0 0.0
    %597 = vmatprep.subr.mxu0 0.0
    %598 = vmatpush1.msra.mxu0 0.0
    %599 = vmatprep.subr.mxu0 0.0
    %600 = vmatpush1.msra.mxu0 0.0
    %601 = vmatprep.subr.mxu0 0.0
    %602 = vmatpush1.msra.mxu0 0.0
    %603 = vmatprep.subr.mxu0 0.0
    %604 = vmatpush1.msra.mxu0 0.0
    %605 = vmatprep.subr.mxu0 0.0
    %606 = vmatpush1.msra.mxu0 0.0
    %607 = vmatprep.subr.mxu0 0.0
    %608 = vmatpush1.msra.mxu0 0.0
    %609 = vmatprep.subr.mxu0 0.0
    %610 = vmatpush1.msra.mxu0 0.0
    %611 = vmatprep.subr.mxu0 0.0
    %612 = vmatpush1.msra.mxu0 0.0
    %613 = vmatprep.subr.mxu0 0.0
    %614 = vmatpush1.msra.mxu0 0.0
    %615 = vmatprep.subr.mxu0 0.0
    %616 = vmatpush1.msra.mxu0 0.0
    %617 = vmatprep.subr.mxu0 0.0
    %618 = vmatpush1.msra.mxu0 0.0
    %619 = vmatprep.subr.mxu0 0.0
    %620 = vmatpush1.msra.mxu0 0.0
    %621 = vmatprep.subr.mxu0 0.0
    %622 = vmatpush1.msra.mxu0 0.0
    %623 = vmatprep.subr.mxu0 0.0
    %624 = vmatpush1.msra.mxu0 0.0
    %625 = vmatprep.subr.mxu0 0.0
    %626 = vmatpush1.msra.mxu0 0.0
    %627 = vmatprep.subr.mxu0 0.0
    %628 = vmatpush1.msra.mxu0 0.0
    %629 = vmatprep.subr.mxu0 0.0
    %630 = vmatpush1.msra.mxu0 0.0
    %631 = vmatprep.subr.mxu0 0.0
    %632 = vmatpush1.msra.mxu0 0.0
    %633 = vmatprep.subr.mxu0 0.0
    %634 = vmatpush1.msra.mxu0 0.0
    %635 = vmatprep.mubr.f32.mxu0 0.0
    %636 = vmatmul.mubr.f32.gmra.mrb[0].mxu0 %v566
    %v637 = vpop.f32.mrb[0].mxu0
    %v638 = vadd.f32 0.0, %v637
    %v639 = vpop.f32.mrb[0].mxu0
    %640 = vmatprep.mubr.f32.mxu0 0.0
    %641 = vmatmul.mubr.f32.gmra.mrb[0].mxu0 %v569
    %v642 = vpop.f32.mrb[0].mxu0
    %v643 = vadd.f32 0.0, %v642
    %v644 = vpop.f32.mrb[0].mxu0
    %645 = vdwg.mxu0
    %v647 = vsel %vm323, %v558, 0
    %v650 = vsel %vm323, %v559, 0
    %652 = vmatprep.subr.mxu0 0.0
    %653 = vmatpush1.msra.mxu0 %v560
    %654 = vmatprep.subr.mxu0 0.0
    %655 = vmatpush1.msra.mxu0 %v561
    %656 = vmatprep.subr.mxu0 0.0
    %657 = vmatpush1.msra.mxu0 %v562
    %658 = vmatprep.subr.mxu0 0.0
    %659 = vmatpush1.msra.mxu0 %v563
    %660 = vmatprep.subr.mxu0 0.0
    %661 = vmatpush1.msra.mxu0 0.0
    %662 = vmatprep.subr.mxu0 0.0
    %663 = vmatpush1.msra.mxu0 0.0
    %664 = vmatprep.subr.mxu0 0.0
    %665 = vmatpush1.msra.mxu0 0.0
    %666 = vmatprep.subr.mxu0 0.0
    %667 = vmatpush1.msra.mxu0 0.0
    %668 = vmatprep.subr.mxu0 0.0
    %669 = vmatpush1.msra.mxu0 0.0
    %670 = vmatprep.subr.mxu0 0.0
    %671 = vmatpush1.msra.mxu0 0.0
    %672 = vmatprep.subr.mxu0 0.0
    %673 = vmatpush1.msra.mxu0 0.0
    %674 = vmatprep.subr.mxu0 0.0
    %675 = vmatpush1.msra.mxu0 0.0
    %676 = vmatprep.subr.mxu0 0.0
    %677 = vmatpush1.msra.mxu0 0.0
    %678 = vmatprep.subr.mxu0 0.0
    %679 = vmatpush1.msra.mxu0 0.0
    %680 = vmatprep.subr.mxu0 0.0
    %681 = vmatpush1.msra.mxu0 0.0
    %682 = vmatprep.subr.mxu0 0.0
    %683 = vmatpush1.msra.mxu0 0.0
    %684 = vmatprep.subr.mxu0 0.0
    %685 = vmatpush1.msra.mxu0 0.0
    %686 = vmatprep.subr.mxu0 0.0
    %687 = vmatpush1.msra.mxu0 0.0
    %688 = vmatprep.subr.mxu0 0.0
    %689 = vmatpush1.msra.mxu0 0.0
    %690 = vmatprep.subr.mxu0 0.0
    %691 = vmatpush1.msra.mxu0 0.0
    %692 = vmatprep.subr.mxu0 0.0
    %693 = vmatpush1.msra.mxu0 0.0
    %694 = vmatprep.subr.mxu0 0.0
    %695 = vmatpush1.msra.mxu0 0.0
    %696 = vmatprep.subr.mxu0 0.0
    %697 = vmatpush1.msra.mxu0 0.0
    %698 = vmatprep.subr.mxu0 0.0
    %699 = vmatpush1.msra.mxu0 0.0
    %700 = vmatprep.subr.mxu0 0.0
    %701 = vmatpush1.msra.mxu0 0.0
    %702 = vmatprep.subr.mxu0 0.0
    %703 = vmatpush1.msra.mxu0 0.0
    %704 = vmatprep.subr.mxu0 0.0
    %705 = vmatpush1.msra.mxu0 0.0
    %706 = vmatprep.subr.mxu0 0.0
    %707 = vmatpush1.msra.mxu0 0.0
    %708 = vmatprep.subr.mxu0 0.0
    %709 = vmatpush1.msra.mxu0 0.0
    %710 = vmatprep.subr.mxu0 0.0
    %711 = vmatpush1.msra.mxu0 0.0
    %712 = vmatprep.subr.mxu0 0.0
    %713 = vmatpush1.msra.mxu0 0.0
    %714 = vmatprep.subr.mxu0 0.0
    %715 = vmatpush1.msra.mxu0 0.0
    %716 = vmatprep.mubr.f32.mxu0 0.0
    %717 = vmatmul.mubr.f32.gmra.mrb[0].mxu0 %v647
    %v718 = vpop.f32.mrb[0].mxu0
    %v719 = vadd.f32 0.0, %v718
    %v720 = vpop.f32.mrb[0].mxu0
    %721 = vmatprep.mubr.f32.mxu0 0.0
    %722 = vmatmul.mubr.f32.gmra.mrb[0].mxu0 %v650
    %v723 = vpop.f32.mrb[0].mxu0
    %v724 = vadd.f32 0.0, %v723
    %v725 = vpop.f32.mrb[0].mxu0
    %726 = vdwg.mxu0
    %v728 = vlaneseq
    %v729 = vshrl.u32 %v728, 7
    %v730 = vsub.s32 0, %v729
    %v731 = vrot.slane %v564, %v730
    %v733 = vadd.f32 %v638, %v731
    %v734 = vadd.f32 %v643, %v731
    %v735 = vadd.f32 %v719, %v731
    %v736 = vadd.f32 %v724, %v731
    %vm737 = vcmask 523264
    %738 = vst.msk [vmem:[%s9] sm:$0xff] %vm737, %v733
    %vm739 = vcmask 516096
    %740 = vst.msk [vmem:[%s9 + $0x8] sm:$0x1] %vm739, %v734
    %741 = vst.msk [vmem:[%s9 + $0x10] sm:$0xff] %vm737, %v735
    %742 = vst.msk [vmem:[%s9 + $0x18] sm:$0x1] %vm739, %v736
    // Predicated region
    $region42: #{tpu_custom_call.1} parent=1 // pred_check
      _
    $region43: #{tpu_custom_call.1} parent=1 // pred_check_branch
      %744 = sbr.rel (0) target = $region45
    $region44: #{tpu_custom_call.1} parent=1 // pred_region
      _
    $region45: #{tpu_custom_call.1} parent=1 // pred_fallthru
      _
    // Predicated region
    $region46: #{tpu_custom_call.1} parent=1 // pred_check
      _
    $region47: #{tpu_custom_call.1} parent=1 // pred_check_branch
      %746 = sbr.rel (0) target = $region49
    $region48: #{tpu_custom_call.1} parent=1 // pred_region
      _
    $region49: #{tpu_custom_call.1} parent=1 // pred_fallthru
      _
    %747 = vsyncpa [#allocation4], 1

</llo_original>
